<compile_context>
chip_gen: v7x
topology: tpu7x:2x2x1
jax: 0.10.0
libtpu: 0.0.40
codegen_flags: <defaults>
</compile_context>

<pallas_src>
import math

import jax
import jax.numpy as jnp
from jax.experimental import pallas as pl
from jax.experimental.pallas import tpu as pltpu


def _make_attn_kernel(embedding_dim: int, compute_dtype):
    """Kernel closure with the static softmax scale / compute dtype baked in."""
    inv_scale = 1.0 / math.sqrt(float(embedding_dim))

    def attn_kernel(x_ref, wk_ref, wq_ref, wv_ref, o_ref):
        # x_ref:        (Bb, T, E)  block of batch elements
        # wk/wq/wv_ref: (E, H)      projection matrices (already transposed)
        # o_ref:        (Bb, T, H)
        bb, t, e = x_ref.shape
        h = wk_ref.shape[1]

        # Fold the batch into the M dimension so each projection is a single
        # (Bb*T, E) @ (E, H) MXU matmul.  bf16 operands, f32 accumulation.
        x2d = x_ref[...].reshape(bb * t, e).astype(compute_dtype)
        wk = wk_ref[...].astype(compute_dtype)
        wq = wq_ref[...].astype(compute_dtype)
        wv = wv_ref[...].astype(compute_dtype)

        k = jnp.dot(x2d, wk, preferred_element_type=jnp.float32).reshape(bb, t, h)
        q = jnp.dot(x2d, wq, preferred_element_type=jnp.float32).reshape(bb, t, h)
        v = jnp.dot(x2d, wv, preferred_element_type=jnp.float32).reshape(bb, t, h)

        # Scale q (T*H elems) instead of the (T*T) logits.
        q = q * inv_scale

        # Transpose-free batched contraction over H: (Bb,T,H)·(Bb,T,H)->(Bb,T,T)
        logits = jnp.einsum(
            "bqh,bkh->bqk",
            q.astype(compute_dtype),
            k.astype(compute_dtype),
            preferred_element_type=jnp.float32,
        )

        # Numerically-stable softmax along the last axis (f32 vector math;
        # EUP reciprocal for the denominator).
        logits = logits - jnp.max(logits, axis=-1, keepdims=True)
        p = jnp.exp(logits)
        p = p * pl.reciprocal(jnp.sum(p, axis=-1, keepdims=True), approx=True)

        # (Bb,T,T) @ (Bb,T,H) -> (Bb,T,H), bf16 operands, f32 accumulation.
        out = jnp.einsum(
            "bqk,bkh->bqh",
            p.astype(compute_dtype),
            v.astype(compute_dtype),
            preferred_element_type=jnp.float32,
        )

        o_ref[...] = out.astype(o_ref.dtype)

    return attn_kernel


def self_attention_head(x, w_key, w_query, w_value, *, batch_block=None,
                        compute_dtype=jnp.bfloat16):
    """
    x:        (B, T, E)  float32
    w_key:    (H, E)     PyTorch nn.Linear weight layout (out, in), bias=False
    w_query:  (H, E)
    w_value:  (H, E)
    returns:  (B, T, H)
    """
    B, T, E = x.shape
    H = w_key.shape[0]

    # Default: process the whole batch in a single grid step (these shapes are
    # tiny; one step amortizes all per-step overhead and fills the MXU rows).
    if batch_block is None:
        batch_block = B
    assert B % batch_block == 0, "batch_block must divide B"
    num_blocks = B // batch_block

    # Glue: transpose weights so the kernel does x @ W  (== x @ weight.T in torch).
    wk_t = jnp.asarray(w_key).T    # (E, H)
    wq_t = jnp.asarray(w_query).T  # (E, H)
    wv_t = jnp.asarray(w_value).T  # (E, H)

    kernel = _make_attn_kernel(E, compute_dtype)

    return pl.pallas_call(
        kernel,
        out_shape=jax.ShapeDtypeStruct((B, T, H), x.dtype),
        grid_spec=pltpu.PrefetchScalarGridSpec(
            num_scalar_prefetch=0,
            grid=(num_blocks,),
            in_specs=[
                pl.BlockSpec((batch_block, T, E), lambda b: (b, 0, 0)),
                pl.BlockSpec((E, H), lambda b: (0, 0)),
                pl.BlockSpec((E, H), lambda b: (0, 0)),
                pl.BlockSpec((E, H), lambda b: (0, 0)),
            ],
            out_specs=pl.BlockSpec((batch_block, T, H), lambda b: (b, 0, 0)),
        ),
        compiler_params=pltpu.CompilerParams(
            dimension_semantics=("parallel",),
        ),
    )(x, wk_t, wq_t, wv_t)


def reference_self_attention_head(x, w_key, w_query, w_value):
    """Pure-JAX f32 reference implementing the PyTorch forward exactly (eval)."""
    E = x.shape[2]
    K = x @ w_key.T
    Q = x @ w_query.T
    V = x @ w_value.T
    A = Q @ jnp.swapaxes(K, -2, -1)
    A = A / math.sqrt(float(E))
    A = jax.nn.softmax(A, axis=-1)
    return A @ V


if __name__ == "__main__":
    # Small shapes consistent with the module: batch=2, seq=8, embedding_dim=32,
    # head_size=32.
    B, T, E, H = 2, 8, 32, 32

    key = jax.random.PRNGKey(0)
    kx, kk, kq, kv = jax.random.split(key, 4)

    x = jax.random.normal(kx, (B, T, E), dtype=jnp.float32)

    # Deterministic parameter init (nn.Linear-like uniform(-1/sqrt(E), 1/sqrt(E))).
    bound = 1.0 / math.sqrt(E)
    w_key = jax.random.uniform(kk, (H, E), jnp.float32, -bound, bound)
    w_query = jax.random.uniform(kq, (H, E), jnp.float32, -bound, bound)
    w_value = jax.random.uniform(kv, (H, E), jnp.float32, -bound, bound)

    out = self_attention_head(x, w_key, w_query, w_value)
    out = jax.block_until_ready(out)

    ref = reference_self_attention_head(x, w_key, w_query, w_value)
    assert out.shape == (B, T, H), out.shape
    # Tolerance loosened for bf16 MXU operands + approx reciprocal (f32 acc).
    assert jnp.allclose(out, ref, atol=2e-2, rtol=2e-2), "mismatch vs reference"

    print("KERNEL_OK")
</pallas_src>

<mosaic_0001>
module attributes {stable_mosaic.version = 11 : i64} {
  func.func @attn_kernel(%arg0: i32, %arg1: memref<2x8x32xf32, #tpu.memory_space<vmem>>, %arg2: memref<32x32xf32, #tpu.memory_space<vmem>>, %arg3: memref<32x32xf32, #tpu.memory_space<vmem>>, %arg4: memref<32x32xf32, #tpu.memory_space<vmem>>, %arg5: memref<2x8x32xf32, #tpu.memory_space<vmem>>) attributes {dimension_semantics = [#tpu.dimension_semantics<parallel>], iteration_bounds = array<i64: 1>, scalar_prefetch = 0 : i64, scratch_operands = 0 : i64, tpu.core_type = #tpu.core_type<tc>, window_params = [{transform_indices = @transform_0, window_bounds = array<i64: 2, 8, 32>}, {pipeline_mode = #tpu.pipeline_mode<synchronous>, transform_indices = @transform_1, window_bounds = array<i64: 32, 32>}, {pipeline_mode = #tpu.pipeline_mode<synchronous>, transform_indices = @transform_2, window_bounds = array<i64: 32, 32>}, {pipeline_mode = #tpu.pipeline_mode<synchronous>, transform_indices = @transform_3, window_bounds = array<i64: 32, 32>}, {transform_indices = @transform_4, window_bounds = array<i64: 2, 8, 32>}]} {
    %c0 = arith.constant 0 : index
    %c0_0 = arith.constant 0 : index
    %c0_1 = arith.constant 0 : index
    %0 = vector.load %arg1[%c0, %c0_0, %c0_1] : memref<2x8x32xf32, #tpu.memory_space<vmem>>, vector<2x8x32xf32>
    %1 = vector.shape_cast %0 : vector<2x8x32xf32> to vector<16x32xf32>
    %2 = arith.truncf %1 : vector<16x32xf32> to vector<16x32xbf16>
    %c0_2 = arith.constant 0 : index
    %c0_3 = arith.constant 0 : index
    %3 = vector.load %arg2[%c0_2, %c0_3] : memref<32x32xf32, #tpu.memory_space<vmem>>, vector<32x32xf32>
    %4 = arith.truncf %3 : vector<32x32xf32> to vector<32x32xbf16>
    %c0_4 = arith.constant 0 : index
    %c0_5 = arith.constant 0 : index
    %5 = vector.load %arg3[%c0_4, %c0_5] : memref<32x32xf32, #tpu.memory_space<vmem>>, vector<32x32xf32>
    %6 = arith.truncf %5 : vector<32x32xf32> to vector<32x32xbf16>
    %c0_6 = arith.constant 0 : index
    %c0_7 = arith.constant 0 : index
    %7 = vector.load %arg4[%c0_6, %c0_7] : memref<32x32xf32, #tpu.memory_space<vmem>>, vector<32x32xf32>
    %8 = arith.truncf %7 : vector<32x32xf32> to vector<32x32xbf16>
    %cst = arith.constant dense<0.000000e+00> : vector<16x32xf32>
    %9 = tpu.matmul %2, %4, %cst {dimension_numbers = #tpu.dot_dimension_numbers<[1], [0], [0], [1], [0, 0, 1, 1], [], []>} : vector<16x32xbf16>, vector<32x32xbf16>, vector<16x32xf32> -> vector<16x32xf32>
    %10 = vector.shape_cast %9 : vector<16x32xf32> to vector<2x8x32xf32>
    %cst_8 = arith.constant dense<0.000000e+00> : vector<16x32xf32>
    %11 = tpu.matmul %2, %6, %cst_8 {dimension_numbers = #tpu.dot_dimension_numbers<[1], [0], [0], [1], [0, 0, 1, 1], [], []>} : vector<16x32xbf16>, vector<32x32xbf16>, vector<16x32xf32> -> vector<16x32xf32>
    %12 = vector.shape_cast %11 : vector<16x32xf32> to vector<2x8x32xf32>
    %cst_9 = arith.constant dense<0.000000e+00> : vector<16x32xf32>
    %13 = tpu.matmul %2, %8, %cst_9 {dimension_numbers = #tpu.dot_dimension_numbers<[1], [0], [0], [1], [0, 0, 1, 1], [], []>} : vector<16x32xbf16>, vector<32x32xbf16>, vector<16x32xf32> -> vector<16x32xf32>
    %14 = vector.shape_cast %13 : vector<16x32xf32> to vector<2x8x32xf32>
    %cst_10 = arith.constant 0.176776692 : f32
    %15 = vector.broadcast %cst_10 : f32 to vector<2x8x32xf32>
    %16 = arith.mulf %12, %15 : vector<2x8x32xf32>
    %17 = arith.truncf %16 : vector<2x8x32xf32> to vector<2x8x32xbf16>
    %18 = arith.truncf %10 : vector<2x8x32xf32> to vector<2x8x32xbf16>
    "tpu.trace_start"() <{level = 10 : i32, message = "bqh,bkh->bqk"}> : () -> ()
    %cst_11 = arith.constant dense<0.000000e+00> : vector<2x8x8xf32>
    %19 = tpu.matmul %17, %18, %cst_11 {dimension_numbers = #tpu.dot_dimension_numbers<[2], [2], [1], [1], [0, 0, 0, 1, 1, 1], [0], [0]>} : vector<2x8x32xbf16>, vector<2x8x32xbf16>, vector<2x8x8xf32> -> vector<2x8x8xf32>
    "tpu.trace_stop"() : () -> ()
    %cst_12 = arith.constant dense<0xFF800000> : vector<2x8xf32>
    %20 = vector.multi_reduction <maximumf>, %19, %cst_12 [2] : vector<2x8x8xf32> to vector<2x8xf32>
    %21 = vector.shape_cast %20 : vector<2x8xf32> to vector<2x8x1xf32>
    %22 = vector.broadcast %21 : vector<2x8x1xf32> to vector<2x8x8xf32>
    %23 = arith.subf %19, %22 : vector<2x8x8xf32>
    %24 = math.exp %23 : vector<2x8x8xf32>
    %cst_13 = arith.constant dense<0.000000e+00> : vector<2x8xf32>
    %25 = vector.multi_reduction <add>, %24, %cst_13 [2] : vector<2x8x8xf32> to vector<2x8xf32>
    %26 = vector.shape_cast %25 : vector<2x8xf32> to vector<2x8x1xf32>
    %27 = tpu.reciprocal %26 {approx = true} : vector<2x8x1xf32> -> vector<2x8x1xf32>
    %28 = vector.broadcast %27 : vector<2x8x1xf32> to vector<2x8x8xf32>
    %29 = arith.mulf %24, %28 : vector<2x8x8xf32>
    %30 = arith.truncf %29 : vector<2x8x8xf32> to vector<2x8x8xbf16>
    %31 = arith.truncf %14 : vector<2x8x32xf32> to vector<2x8x32xbf16>
    "tpu.trace_start"() <{level = 10 : i32, message = "bqk,bkh->bqh"}> : () -> ()
    %cst_14 = arith.constant dense<0.000000e+00> : vector<2x8x32xf32>
    %32 = tpu.matmul %30, %31, %cst_14 {dimension_numbers = #tpu.dot_dimension_numbers<[2], [1], [1], [2], [0, 0, 0, 1, 1, 2], [0], [0]>} : vector<2x8x8xbf16>, vector<2x8x32xbf16>, vector<2x8x32xf32> -> vector<2x8x32xf32>
    "tpu.trace_stop"() : () -> ()
    %c0_15 = arith.constant 0 : index
    %c0_16 = arith.constant 0 : index
    %c0_17 = arith.constant 0 : index
    %33 = vector.load %arg5[%c0_15, %c0_16, %c0_17] : memref<2x8x32xf32, #tpu.memory_space<vmem>>, vector<2x8x32xf32>
    tpu.vector_store %arg5[%c0_15, %c0_16, %c0_17], %32 {strides = array<i32>} : memref<2x8x32xf32, #tpu.memory_space<vmem>>, vector<2x8x32xf32>,
    return
  }
  func.func @transform_0(%arg0: i32) -> (i32, i32, i32) {
    %c0_i32 = arith.constant 0 : i32
    %c0_i32_0 = arith.constant 0 : i32
    %c0_i32_1 = arith.constant 0 : i32
    return %arg0, %c0_i32, %c0_i32_0 : i32, i32, i32
  }
  func.func @transform_1(%arg0: i32) -> (i32, i32) {
    %c0_i32 = arith.constant 0 : i32
    %c0_i32_0 = arith.constant 0 : i32
    %c0_i32_1 = arith.constant 0 : i32
    return %c0_i32, %c0_i32_0 : i32, i32
  }
  func.func @transform_2(%arg0: i32) -> (i32, i32) {
    %c0_i32 = arith.constant 0 : i32
    %c0_i32_0 = arith.constant 0 : i32
    %c0_i32_1 = arith.constant 0 : i32
    return %c0_i32, %c0_i32_0 : i32, i32
  }
  func.func @transform_3(%arg0: i32) -> (i32, i32) {
    %c0_i32 = arith.constant 0 : i32
    %c0_i32_0 = arith.constant 0 : i32
    %c0_i32_1 = arith.constant 0 : i32
    return %c0_i32, %c0_i32_0 : i32, i32
  }
  func.func @transform_4(%arg0: i32) -> (i32, i32, i32) {
    %c0_i32 = arith.constant 0 : i32
    %c0_i32_0 = arith.constant 0 : i32
    %c0_i32_1 = arith.constant 0 : i32
    return %arg0, %c0_i32, %c0_i32_0 : i32, i32, i32
  }
}

</mosaic_0001>

<llo_original>
// kernel: tpu_custom_call.1
$region0: #{tpu_custom_call.1}
  #allocation0 [shape = 'u32[]', space=smem, size = 0x4, offset = 0x4, fixed_abs, tag = 'smem constant byte address 0x4 - core index']
  #allocation1 [shape = 'u32[144,128]{1,0:T(1,128)}', space=vmem, size = 0x12000, scoped, tag = 'internal scratch']
  %s0 = inlined_call_operand.hbm [shape: f32[2,8,32], index: 0, kind: input, shape index: {}]
  %s1 = inlined_call_operand.hbm [shape: f32[32,32], index: 1, kind: input, shape index: {}]
  %s2 = inlined_call_operand.hbm [shape: f32[32,32], index: 2, kind: input, shape index: {}]
  %s3 = inlined_call_operand.hbm [shape: f32[32,32], index: 3, kind: input, shape index: {}]
  %s4 = inlined_call_operand.hbm [shape: f32[2,8,32], index: 4, kind: output, shape index: {}]
  %s5 = sld [smem:[#allocation0]]
  $region42: #{tpu_custom_call.1} parent=0
    _
  %s7 = ssub.s32 1, %s5
  %s8 = scalar_select 0, %s7, %s5
  $region1: #{tpu_custom_call.1} parent=0
    #allocation2 [shape = 'u8[8192]{0}', space=vmem, size = 0x2000, scoped, tag = 'input window, operand 0, single buffered']
    #allocation3 [shape = 's32[1]{0}', space=sflag, size = 0x4, scoped, tag = 'scoped memory for tpu_custom_call.1']
    #allocation4 [shape = 's32[1]{0}', space=sflag, size = 0x4, scoped, tag = 'scoped memory for tpu_custom_call.1']
    #allocation5 [shape = 'u8[16384]{0}', space=vmem, size = 0x4000, scoped, tag = 'input window, operand 1, single buffered']
    #allocation6 [shape = 's32[1]{0}', space=sflag, size = 0x4, scoped, tag = 'scoped memory for tpu_custom_call.1']
    #allocation7 [shape = 'u8[16384]{0}', space=vmem, size = 0x4000, scoped, tag = 'input window, operand 2, single buffered']
    #allocation8 [shape = 'u8[16384]{0}', space=vmem, size = 0x4000, scoped, tag = 'input window, operand 3, single buffered']
    #allocation9 [shape = 's32[1]{0}', space=sflag, size = 0x4, scoped, tag = 'scoped memory for tpu_custom_call.1']
    #allocation10 [shape = 'u8[8192]{0}', space=vmem, size = 0x2000, scoped, tag = 'output window, operand 0, single buffered']
    %9 = vsyncpa [#allocation3], 0
    %10 = vsyncpa [#allocation6], 0
    %11 = vsyncpa [#allocation9], 0
    %12 = vsyncpa [#allocation4], 0
    // Predicated region
    $region2: #{tpu_custom_call.1} parent=1 // pred_check
      _
    $region3: #{tpu_custom_call.1} parent=1 // pred_check_branch
      %14 = sbr.rel (0) target = $region5
    $region4: #{tpu_custom_call.1} parent=1 // pred_region
      %s16 = ssub.s32 256, 256
      %17 = vsyncadd [#allocation3], %s16
      %s18 = sshll.u32 [#allocation2], 4
      %s19 = int_to_ptr.vmem [resolvable:$true] %s18
      %24 = dma.hbm_to_vmem [thread:$0]  %s0, 256, %s19, [#allocation3], 128, 128, 8
    $region5: #{tpu_custom_call.1} parent=1 // pred_fallthru
      _
    // Predicated region
    $region6: #{tpu_custom_call.1} parent=1 // pred_check
      _
    $region7: #{tpu_custom_call.1} parent=1 // pred_check_branch
      %26 = sbr.rel (0) target = $region9
    $region8: #{tpu_custom_call.1} parent=1 // pred_region
      %s28 = ssub.s32 512, 512
      %29 = vsyncadd [#allocation6], %s28
      %s30 = sshll.u32 [#allocation5], 4
      %s31 = int_to_ptr.vmem [resolvable:$true] %s30
      %36 = dma.hbm_to_vmem [thread:$0]  %s1, 512, %s31, [#allocation6], 128, 128, 8
    $region9: #{tpu_custom_call.1} parent=1 // pred_fallthru
      _
    // Predicated region
    $region10: #{tpu_custom_call.1} parent=1 // pred_check
      _
    $region11: #{tpu_custom_call.1} parent=1 // pred_check_branch
      %38 = sbr.rel (0) target = $region13
    $region12: #{tpu_custom_call.1} parent=1 // pred_region
      %s40 = ssub.s32 512, 512
      %41 = vsyncadd [#allocation6], %s40
      %s42 = sshll.u32 [#allocation7], 4
      %s43 = int_to_ptr.vmem [resolvable:$true] %s42
      %48 = dma.hbm_to_vmem [thread:$0]  %s2, 512, %s43, [#allocation6], 128, 128, 8
    $region13: #{tpu_custom_call.1} parent=1 // pred_fallthru
      _
    // Predicated region
    $region14: #{tpu_custom_call.1} parent=1 // pred_check
      _
    $region15: #{tpu_custom_call.1} parent=1 // pred_check_branch
      %50 = sbr.rel (0) target = $region17
    $region16: #{tpu_custom_call.1} parent=1 // pred_region
      %s52 = ssub.s32 512, 512
      %53 = vsyncadd [#allocation9], %s52
      %s54 = sshll.u32 [#allocation8], 4
      %s55 = int_to_ptr.vmem [resolvable:$true] %s54
      %60 = dma.hbm_to_vmem [thread:$0]  %s3, 512, %s55, [#allocation9], 128, 128, 8
    $region17: #{tpu_custom_call.1} parent=1 // pred_fallthru
      _
    // Predicated region
    $region18: #{tpu_custom_call.1} parent=1 // pred_check
      _
    $region19: #{tpu_custom_call.1} parent=1 // pred_check_branch
      %62 = sbr.rel (0) target = $region21
    $region20: #{tpu_custom_call.1} parent=1 // pred_region
      %63 = dma.done [#allocation3], 256
    $region21: #{tpu_custom_call.1} parent=1 // pred_fallthru
      _
    // Predicated region
    $region22: #{tpu_custom_call.1} parent=1 // pred_check
      _
    $region23: #{tpu_custom_call.1} parent=1 // pred_check_branch
      %65 = sbr.rel (0) target = $region25
    $region24: #{tpu_custom_call.1} parent=1 // pred_region
      %66 = dma.done [#allocation6], 512
    $region25: #{tpu_custom_call.1} parent=1 // pred_fallthru
      _
    // Predicated region
    $region26: #{tpu_custom_call.1} parent=1 // pred_check
      _
    $region27: #{tpu_custom_call.1} parent=1 // pred_check_branch
      %68 = sbr.rel (0) target = $region29
    $region28: #{tpu_custom_call.1} parent=1 // pred_region
      %69 = dma.done [#allocation6], 512
    $region29: #{tpu_custom_call.1} parent=1 // pred_fallthru
      _
    // Predicated region
    $region30: #{tpu_custom_call.1} parent=1 // pred_check
      _
    $region31: #{tpu_custom_call.1} parent=1 // pred_check_branch
      %71 = sbr.rel (0) target = $region33
    $region32: #{tpu_custom_call.1} parent=1 // pred_region
      %72 = dma.done [#allocation9], 512
    $region33: #{tpu_custom_call.1} parent=1 // pred_fallthru
      _
    %v74 = vld [vmem:[#allocation2] sm:$0xff]
    %v75 = vld [vmem:[#allocation2 + $0x8] sm:$0xff]
    %v76 = vpack.c.bf16 %v75, %v74
    %v77 = vld [vmem:[#allocation5] sm:$0xff]
    %v78 = vld [vmem:[#allocation5 + $0x8] sm:$0xff]
    %v79 = vld [vmem:[#allocation5 + $0x10] sm:$0xff]
    %v80 = vld [vmem:[#allocation5 + $0x18] sm:$0xff]
    %v81 = vpack.c.bf16 %v78, %v77
    %v82 = vpack.c.bf16 %v80, %v79
    %v83 = vld [vmem:[#allocation7] sm:$0xff]
    %v84 = vld [vmem:[#allocation7 + $0x8] sm:$0xff]
    %v85 = vld [vmem:[#allocation7 + $0x10] sm:$0xff]
    %v86 = vld [vmem:[#allocation7 + $0x18] sm:$0xff]
    %v87 = vpack.c.bf16 %v84, %v83
    %v88 = vpack.c.bf16 %v86, %v85
    %v89 = vld [vmem:[#allocation8] sm:$0xff]
    %v90 = vld [vmem:[#allocation8 + $0x8] sm:$0xff]
    %v91 = vld [vmem:[#allocation8 + $0x10] sm:$0xff]
    %v92 = vld [vmem:[#allocation8 + $0x18] sm:$0xff]
    %v93 = vpack.c.bf16 %v90, %v89
    %v94 = vpack.c.bf16 %v92, %v91
    %vm95 = vcmask 261120
    %v97 = vsel %vm95, %v76, 0
    %99 = vmatprep.subr.bf16.mxu0 0
    %100 = vmatpush1.bf16.msra.mxu0 %v81
    %101 = vmatprep.subr.bf16.mxu0 0
    %102 = vmatpush1.bf16.msra.mxu0 %v82
    %103 = vmatprep.subr.bf16.mxu0 0
    %104 = vmatpush1.bf16.msra.mxu0 0
    %105 = vmatprep.subr.bf16.mxu0 0
    %106 = vmatpush1.bf16.msra.mxu0 0
    %107 = vmatprep.subr.bf16.mxu0 0
    %108 = vmatpush1.bf16.msra.mxu0 0
    %109 = vmatprep.subr.bf16.mxu0 0
    %110 = vmatpush1.bf16.msra.mxu0 0
    %111 = vmatprep.subr.bf16.mxu0 0
    %112 = vmatpush1.bf16.msra.mxu0 0
    %113 = vmatprep.subr.bf16.mxu0 0
    %114 = vmatpush1.bf16.msra.mxu0 0
    %115 = vmatprep.subr.bf16.mxu0 0
    %116 = vmatpush1.bf16.msra.mxu0 0
    %117 = vmatprep.subr.bf16.mxu0 0
    %118 = vmatpush1.bf16.msra.mxu0 0
    %119 = vmatprep.subr.bf16.mxu0 0
    %120 = vmatpush1.bf16.msra.mxu0 0
    %121 = vmatprep.subr.bf16.mxu0 0
    %122 = vmatpush1.bf16.msra.mxu0 0
    %123 = vmatprep.subr.bf16.mxu0 0
    %124 = vmatpush1.bf16.msra.mxu0 0
    %125 = vmatprep.subr.bf16.mxu0 0
    %126 = vmatpush1.bf16.msra.mxu0 0
    %127 = vmatprep.subr.bf16.mxu0 0
    %128 = vmatpush1.bf16.msra.mxu0 0
    %129 = vmatprep.subr.bf16.mxu0 0
    %130 = vmatpush1.bf16.msra.mxu0 0
    %131 = vmatprep.mubr.bf16.mxu0 0
    %132 = vmatmul.mubr.bf16.gmra.mrb[0].mxu0 %v97
    %v133 = vpop.f32.mrb[0].mxu0
    %v134 = vadd.f32 0.0, %v133
    %v135 = vpop.f32.mrb[0].mxu0
    %v136 = vpop.f32.mrb[0].mxu0
    %v137 = vadd.f32 0.0, %v136
    %v138 = vpop.f32.mrb[0].mxu0
    %139 = vdwg.mxu0
    %140 = vmatprep.subr.bf16.mxu0 0
    %141 = vmatpush1.bf16.msra.mxu0 %v87
    %142 = vmatprep.subr.bf16.mxu0 0
    %143 = vmatpush1.bf16.msra.mxu0 %v88
    %144 = vmatprep.subr.bf16.mxu0 0
    %145 = vmatpush1.bf16.msra.mxu0 0
    %146 = vmatprep.subr.bf16.mxu0 0
    %147 = vmatpush1.bf16.msra.mxu0 0
    %148 = vmatprep.subr.bf16.mxu0 0
    %149 = vmatpush1.bf16.msra.mxu0 0
    %150 = vmatprep.subr.bf16.mxu0 0
    %151 = vmatpush1.bf16.msra.mxu0 0
    %152 = vmatprep.subr.bf16.mxu0 0
    %153 = vmatpush1.bf16.msra.mxu0 0
    %154 = vmatprep.subr.bf16.mxu0 0
    %155 = vmatpush1.bf16.msra.mxu0 0
    %156 = vmatprep.subr.bf16.mxu0 0
    %157 = vmatpush1.bf16.msra.mxu0 0
    %158 = vmatprep.subr.bf16.mxu0 0
    %159 = vmatpush1.bf16.msra.mxu0 0
    %160 = vmatprep.subr.bf16.mxu0 0
    %161 = vmatpush1.bf16.msra.mxu0 0
    %162 = vmatprep.subr.bf16.mxu0 0
    %163 = vmatpush1.bf16.msra.mxu0 0
    %164 = vmatprep.subr.bf16.mxu0 0
    %165 = vmatpush1.bf16.msra.mxu0 0
    %166 = vmatprep.subr.bf16.mxu0 0
    %167 = vmatpush1.bf16.msra.mxu0 0
    %168 = vmatprep.subr.bf16.mxu0 0
    %169 = vmatpush1.bf16.msra.mxu0 0
    %170 = vmatprep.subr.bf16.mxu0 0
    %171 = vmatpush1.bf16.msra.mxu0 0
    %172 = vmatprep.mubr.bf16.mxu0 0
    %173 = vmatmul.mubr.bf16.gmra.mrb[0].mxu0 %v97
    %v174 = vpop.f32.mrb[0].mxu0
    %v175 = vadd.f32 0.0, %v174
    %v176 = vpop.f32.mrb[0].mxu0
    %v177 = vpop.f32.mrb[0].mxu0
    %v178 = vadd.f32 0.0, %v177
    %v179 = vpop.f32.mrb[0].mxu0
    %180 = vdwg.mxu0
    %181 = vmatprep.subr.bf16.mxu0 0
    %182 = vmatpush1.bf16.msra.mxu0 %v93
    %183 = vmatprep.subr.bf16.mxu0 0
    %184 = vmatpush1.bf16.msra.mxu0 %v94
    %185 = vmatprep.subr.bf16.mxu0 0
    %186 = vmatpush1.bf16.msra.mxu0 0
    %187 = vmatprep.subr.bf16.mxu0 0
    %188 = vmatpush1.bf16.msra.mxu0 0
    %189 = vmatprep.subr.bf16.mxu0 0
    %190 = vmatpush1.bf16.msra.mxu0 0
    %191 = vmatprep.subr.bf16.mxu0 0
    %192 = vmatpush1.bf16.msra.mxu0 0
    %193 = vmatprep.subr.bf16.mxu0 0
    %194 = vmatpush1.bf16.msra.mxu0 0
    %195 = vmatprep.subr.bf16.mxu0 0
    %196 = vmatpush1.bf16.msra.mxu0 0
    %197 = vmatprep.subr.bf16.mxu0 0
    %198 = vmatpush1.bf16.msra.mxu0 0
    %199 = vmatprep.subr.bf16.mxu0 0
    %200 = vmatpush1.bf16.msra.mxu0 0
    %201 = vmatprep.subr.bf16.mxu0 0
    %202 = vmatpush1.bf16.msra.mxu0 0
    %203 = vmatprep.subr.bf16.mxu0 0
    %204 = vmatpush1.bf16.msra.mxu0 0
    %205 = vmatprep.subr.bf16.mxu0 0
    %206 = vmatpush1.bf16.msra.mxu0 0
    %207 = vmatprep.subr.bf16.mxu0 0
    %208 = vmatpush1.bf16.msra.mxu0 0
    %209 = vmatprep.subr.bf16.mxu0 0
    %210 = vmatpush1.bf16.msra.mxu0 0
    %211 = vmatprep.subr.bf16.mxu0 0
    %212 = vmatpush1.bf16.msra.mxu0 0
    %213 = vmatprep.mubr.bf16.mxu0 0
    %214 = vmatmul.mubr.bf16.gmra.mrb[0].mxu0 %v97
    %v215 = vpop.f32.mrb[0].mxu0
    %v216 = vadd.f32 0.0, %v215
    %v217 = vpop.f32.mrb[0].mxu0
    %v218 = vpop.f32.mrb[0].mxu0
    %v219 = vadd.f32 0.0, %v218
    %v220 = vpop.f32.mrb[0].mxu0
    %221 = vdwg.mxu0
    %v222 = vmul.f32 %v175, 0.17677669
    %v223 = vmul.f32 %v178, 0.17677669
    %v224 = vpack.c.bf16 %v222, %v222
    %v225 = vpack.c.bf16 %v223, %v223
    %v226 = vpack.c.bf16 %v134, %v134
    %v227 = vpack.c.bf16 %v137, %v137
    %v229 = vsel %vm95, %v224, 0
    %v232 = vsel %vm95, %v226, 0
    %234 = vmatprep.subr.bf16.mxu0 0
    %235 = vmatpush1.bf16.xpose.msra.mxu0 %v232
    %236 = vmatprep.subr.bf16.mxu0 0
    %237 = vmatpush1.bf16.xpose.msra.mxu0 0
    %238 = vmatprep.subr.bf16.mxu0 0
    %239 = vmatpush1.bf16.xpose.msra.mxu0 0
    %240 = vmatprep.subr.bf16.mxu0 0
    %241 = vmatpush1.bf16.xpose.msra.mxu0 0
    %242 = vmatprep.subr.bf16.mxu0 0
    %243 = vmatpush1.bf16.xpose.msra.mxu0 0
    %244 = vmatprep.subr.bf16.mxu0 0
    %245 = vmatpush1.bf16.xpose.msra.mxu0 0
    %246 = vmatprep.subr.bf16.mxu0 0
    %247 = vmatpush1.bf16.xpose.msra.mxu0 0
    %248 = vmatprep.subr.bf16.mxu0 0
    %249 = vmatpush1.bf16.xpose.msra.mxu0 0
    %250 = vmatprep.subr.bf16.mxu0 0
    %251 = vmatpush1.bf16.xpose.msra.mxu0 0
    %252 = vmatprep.subr.bf16.mxu0 0
    %253 = vmatpush1.bf16.xpose.msra.mxu0 0
    %254 = vmatprep.subr.bf16.mxu0 0
    %255 = vmatpush1.bf16.xpose.msra.mxu0 0
    %256 = vmatprep.subr.bf16.mxu0 0
    %257 = vmatpush1.bf16.xpose.msra.mxu0 0
    %258 = vmatprep.subr.bf16.mxu0 0
    %259 = vmatpush1.bf16.xpose.msra.mxu0 0
    %260 = vmatprep.subr.bf16.mxu0 0
    %261 = vmatpush1.bf16.xpose.msra.mxu0 0
    %262 = vmatprep.subr.bf16.mxu0 0
    %263 = vmatpush1.bf16.xpose.msra.mxu0 0
    %264 = vmatprep.subr.bf16.mxu0 0
    %265 = vmatpush1.bf16.xpose.msra.mxu0 0
    %266 = vmatprep.mubr.bf16.mxu0 0
    %267 = vmatmul.mubr.bf16.gmra.mrb[0].mxu0 %v229
    %v268 = vpop.f32.mrb[0].mxu0
    %v269 = vadd.f32 0.0, %v268
    %v270 = vpop.f32.mrb[0].mxu0
    %v271 = vpop.f32.mrb[0].mxu0
    %v272 = vpop.f32.mrb[0].mxu0
    %273 = vdwg.mxu0
    %v275 = vsel %vm95, %v225, 0
    %v278 = vsel %vm95, %v227, 0
    %280 = vmatprep.subr.bf16.mxu0 0
    %281 = vmatpush1.bf16.xpose.msra.mxu0 %v278
    %282 = vmatprep.subr.bf16.mxu0 0
    %283 = vmatpush1.bf16.xpose.msra.mxu0 0
    %284 = vmatprep.subr.bf16.mxu0 0
    %285 = vmatpush1.bf16.xpose.msra.mxu0 0
    %286 = vmatprep.subr.bf16.mxu0 0
    %287 = vmatpush1.bf16.xpose.msra.mxu0 0
    %288 = vmatprep.subr.bf16.mxu0 0
    %289 = vmatpush1.bf16.xpose.msra.mxu0 0
    %290 = vmatprep.subr.bf16.mxu0 0
    %291 = vmatpush1.bf16.xpose.msra.mxu0 0
    %292 = vmatprep.subr.bf16.mxu0 0
    %293 = vmatpush1.bf16.xpose.msra.mxu0 0
    %294 = vmatprep.subr.bf16.mxu0 0
    %295 = vmatpush1.bf16.xpose.msra.mxu0 0
    %296 = vmatprep.subr.bf16.mxu0 0
    %297 = vmatpush1.bf16.xpose.msra.mxu0 0
    %298 = vmatprep.subr.bf16.mxu0 0
    %299 = vmatpush1.bf16.xpose.msra.mxu0 0
    %300 = vmatprep.subr.bf16.mxu0 0
    %301 = vmatpush1.bf16.xpose.msra.mxu0 0
    %302 = vmatprep.subr.bf16.mxu0 0
    %303 = vmatpush1.bf16.xpose.msra.mxu0 0
    %304 = vmatprep.subr.bf16.mxu0 0
    %305 = vmatpush1.bf16.xpose.msra.mxu0 0
    %306 = vmatprep.subr.bf16.mxu0 0
    %307 = vmatpush1.bf16.xpose.msra.mxu0 0
    %308 = vmatprep.subr.bf16.mxu0 0
    %309 = vmatpush1.bf16.xpose.msra.mxu0 0
    %310 = vmatprep.subr.bf16.mxu0 0
    %311 = vmatpush1.bf16.xpose.msra.mxu0 0
    %312 = vmatprep.mubr.bf16.mxu0 0
    %313 = vmatmul.mubr.bf16.gmra.mrb[0].mxu0 %v275
    %v314 = vpop.f32.mrb[0].mxu0
    %v315 = vadd.f32 0.0, %v314
    %v316 = vpop.f32.mrb[0].mxu0
    %v317 = vpop.f32.mrb[0].mxu0
    %v318 = vpop.f32.mrb[0].mxu0
    %319 = vdwg.mxu0
    %vm320 = vcmask 64512
    %v321 = vsel %vm320, %v269, -inf
    %322 = vmax.xlane.f32.xlu0 %v321
    %v323 = vpop.xlane.xlu0 %322
    %v324 = vsel %vm320, %v315, -inf
    %325 = vmax.xlane.f32.xlu0 %v324
    %v326 = vpop.xlane.xlu0 %325
    %v327 = vsub.f32 %v269, %v323
    %v328 = vsub.f32 %v315, %v326
    %v329 = vmul.f32 %v327, 1.442695
    %v330 = vpow.pop %v329
    %v331 = vmul.f32 %v328, 1.442695
    %v332 = vpow.pop %v331
    %v333 = vsel %vm320, %v330, 0.0
    %334 = vadd.xlane.f32.xlu0 %v333
    %v335 = vpop.xlane.xlu0 %334
    %v336 = vsel %vm320, %v332, 0.0
    %337 = vadd.xlane.f32.xlu0 %v336
    %v338 = vpop.xlane.xlu0 %337
    %v339 = vrcp.pop %v335
    %v340 = vrcp.pop %v338
    %v341 = vmul.f32 %v330, %v339
    %v342 = vmul.f32 %v332, %v340
    %v343 = vpack.c.bf16 %v341, %v341
    %v344 = vpack.c.bf16 %v342, %v342
    %v345 = vpack.c.bf16 %v216, %v216
    %v346 = vpack.c.bf16 %v219, %v219
    %v348 = vsel %vm320, %v343, 0
    %vm350 = vcmask 1043456
    %v352 = vsel %vm350, %v345, 0
    %354 = vmatprep.subr.bf16.mxu0 0
    %355 = vmatpush1.bf16.msra.mxu0 %v352
    %356 = vmatprep.subr.bf16.mxu0 0
    %357 = vmatpush1.bf16.msra.mxu0 0
    %358 = vmatprep.subr.bf16.mxu0 0
    %359 = vmatpush1.bf16.msra.mxu0 0
    %360 = vmatprep.subr.bf16.mxu0 0
    %361 = vmatpush1.bf16.msra.mxu0 0
    %362 = vmatprep.subr.bf16.mxu0 0
    %363 = vmatpush1.bf16.msra.mxu0 0
    %364 = vmatprep.subr.bf16.mxu0 0
    %365 = vmatpush1.bf16.msra.mxu0 0
    %366 = vmatprep.subr.bf16.mxu0 0
    %367 = vmatpush1.bf16.msra.mxu0 0
    %368 = vmatprep.subr.bf16.mxu0 0
    %369 = vmatpush1.bf16.msra.mxu0 0
    %370 = vmatprep.subr.bf16.mxu0 0
    %371 = vmatpush1.bf16.msra.mxu0 0
    %372 = vmatprep.subr.bf16.mxu0 0
    %373 = vmatpush1.bf16.msra.mxu0 0
    %374 = vmatprep.subr.bf16.mxu0 0
    %375 = vmatpush1.bf16.msra.mxu0 0
    %376 = vmatprep.subr.bf16.mxu0 0
    %377 = vmatpush1.bf16.msra.mxu0 0
    %378 = vmatprep.subr.bf16.mxu0 0
    %379 = vmatpush1.bf16.msra.mxu0 0
    %380 = vmatprep.subr.bf16.mxu0 0
    %381 = vmatpush1.bf16.msra.mxu0 0
    %382 = vmatprep.subr.bf16.mxu0 0
    %383 = vmatpush1.bf16.msra.mxu0 0
    %384 = vmatprep.subr.bf16.mxu0 0
    %385 = vmatpush1.bf16.msra.mxu0 0
    %386 = vmatprep.mubr.bf16.mxu0 0
    %387 = vmatmul.mubr.bf16.gmra.mrb[0].mxu0 %v348
    %v388 = vpop.f32.mrb[0].mxu0
    %v389 = vadd.f32 0.0, %v388
    %v390 = vpop.f32.mrb[0].mxu0
    %v391 = vpop.f32.mrb[0].mxu0
    %v392 = vpop.f32.mrb[0].mxu0
    %393 = vdwg.mxu0
    %v395 = vsel %vm320, %v344, 0
    %v398 = vsel %vm350, %v346, 0
    %400 = vmatprep.subr.bf16.mxu0 0
    %401 = vmatpush1.bf16.msra.mxu0 %v398
    %402 = vmatprep.subr.bf16.mxu0 0
    %403 = vmatpush1.bf16.msra.mxu0 0
    %404 = vmatprep.subr.bf16.mxu0 0
    %405 = vmatpush1.bf16.msra.mxu0 0
    %406 = vmatprep.subr.bf16.mxu0 0
    %407 = vmatpush1.bf16.msra.mxu0 0
    %408 = vmatprep.subr.bf16.mxu0 0
    %409 = vmatpush1.bf16.msra.mxu0 0
    %410 = vmatprep.subr.bf16.mxu0 0
    %411 = vmatpush1.bf16.msra.mxu0 0
    %412 = vmatprep.subr.bf16.mxu0 0
    %413 = vmatpush1.bf16.msra.mxu0 0
    %414 = vmatprep.subr.bf16.mxu0 0
    %415 = vmatpush1.bf16.msra.mxu0 0
    %416 = vmatprep.subr.bf16.mxu0 0
    %417 = vmatpush1.bf16.msra.mxu0 0
    %418 = vmatprep.subr.bf16.mxu0 0
    %419 = vmatpush1.bf16.msra.mxu0 0
    %420 = vmatprep.subr.bf16.mxu0 0
    %421 = vmatpush1.bf16.msra.mxu0 0
    %422 = vmatprep.subr.bf16.mxu0 0
    %423 = vmatpush1.bf16.msra.mxu0 0
    %424 = vmatprep.subr.bf16.mxu0 0
    %425 = vmatpush1.bf16.msra.mxu0 0
    %426 = vmatprep.subr.bf16.mxu0 0
    %427 = vmatpush1.bf16.msra.mxu0 0
    %428 = vmatprep.subr.bf16.mxu0 0
    %429 = vmatpush1.bf16.msra.mxu0 0
    %430 = vmatprep.subr.bf16.mxu0 0
    %431 = vmatpush1.bf16.msra.mxu0 0
    %432 = vmatprep.mubr.bf16.mxu0 0
    %433 = vmatmul.mubr.bf16.gmra.mrb[0].mxu0 %v395
    %v434 = vpop.f32.mrb[0].mxu0
    %v435 = vadd.f32 0.0, %v434
    %v436 = vpop.f32.mrb[0].mxu0
    %v437 = vpop.f32.mrb[0].mxu0
    %v438 = vpop.f32.mrb[0].mxu0
    %439 = vdwg.mxu0
    %440 = vst.msk [vmem:[#allocation10] sm:$0xff] %vm95, %v389
    %441 = vst.msk [vmem:[#allocation10 + $0x8] sm:$0xff] %vm95, %v435
    // Predicated region
    $region34: #{tpu_custom_call.1} parent=1 // pred_check
      _
    $region35: #{tpu_custom_call.1} parent=1 // pred_check_branch
      %443 = sbr.rel (0) target = $region37
    $region36: #{tpu_custom_call.1} parent=1 // pred_region
      %s445 = ssub.s32 256, 256
      %446 = vsyncadd [#allocation4], %s445
      %s447 = sshll.u32 [#allocation10], 4
      %s448 = int_to_ptr.vmem [resolvable:$true] %s447
      %453 = dma.vmem_to_hbm [thread:$0]  %s448, 256, %s4, [#allocation4], 128, 128, 8
    $region37: #{tpu_custom_call.1} parent=1 // pred_fallthru
      _
    // Predicated region
    $region38: #{tpu_custom_call.1} parent=1 // pred_check
      _
    $region39: #{tpu_custom_call.1} parent=1 // pred_check_branch
      %455 = sbr.rel (0) target = $region41
    $region40: #{tpu_custom_call.1} parent=1 // pred_region
      %456 = dma.done [#allocation4], 256
    $region41: #{tpu_custom_call.1} parent=1 // pred_fallthru
      _
    %457 = vsyncpa [#allocation3], 1
    %458 = vsyncpa [#allocation6], 1
    %459 = vsyncpa [#allocation9], 1
    %460 = vsyncpa [#allocation4], 1

</llo_original>
